<compile_context>
chip_gen: v7x
topology: tpu7x:2x2x1
jax: 0.10.0
libtpu: 0.0.40
codegen_flags: <defaults>
</compile_context>

<pallas_src>
import functools

import jax
import jax.numpy as jnp
from jax.experimental import pallas as pl
from jax.experimental.pallas import tpu as pltpu


def _masked_l1_kernel(pred_ref, gt_ref, sum_ref, cnt_ref, *, rows, threshold):
    """Accumulate masked |diff| and valid-count partials into (8, C) outputs."""
    c = pl.program_id(0)            # parallel split (exploits v7x's 2 TCs)
    k = pl.program_id(1)            # reduction axis over row tiles
    grid_k = pl.num_programs(1)

    @pl.when(k == 0)
    def _():
        sum_ref[...] = jnp.zeros_like(sum_ref)
        cnt_ref[...] = jnp.zeros_like(cnt_ref)

    tile_rows, lanes = gt_ref.shape

    gt = gt_ref[...].astype(jnp.float32)
    pred = pred_ref[...].astype(jnp.float32)

    # Logical (unclamped) first row of this tile. Rows >= `rows` are either
    # out-of-bounds garbage from a partial block or a clamped duplicate block
    # and must not contribute to either sum or count.
    row0 = (c * grid_k + k) * tile_rows
    row_ids = jax.lax.broadcasted_iota(jnp.int32, (tile_rows, 1), 0) + row0
    in_bounds = row_ids < rows                       # (tile_rows, 1) broadcast

    valid = (gt > 0.0) & in_bounds
    gt_n = jnp.minimum(gt, jnp.float32(threshold)) * jnp.float32(1.0 / threshold)
    # jnp.where (not multiply) so NaN/Inf garbage in masked lanes can't leak.
    diff = jnp.where(valid, jnp.abs(gt_n - pred), 0.0)
    mask = valid.astype(jnp.float32)

    # Partial reduce along the leading (sublane-batched) axis only — VPU adds,
    # no cross-lane work. The single cross-lane reduce is done in the wrapper.
    sum_ref[...] += jnp.sum(diff.reshape(tile_rows // 8, 8, lanes), axis=0)
    cnt_ref[...] += jnp.sum(mask.reshape(tile_rows // 8, 8, lanes), axis=0)


def masked_l1_loss(prediction, target, threshold=100, *,
                   lanes=512, max_tile_rows=512, num_splits=2):
    """prediction: (N, 1, H, W), target: (N, H, W). Returns scalar f32."""
    pred_flat = prediction.reshape(-1)    # squeeze(1) + flatten (same order)
    gt_flat = target.reshape(-1)
    total = int(gt_flat.shape[0])
    assert int(pred_flat.shape[0]) == total

    # Lane-dense 2D view. Pad (zeros => gt <= 0 => masked out) only when the
    # element count isn't already a multiple of `lanes`.
    rem = (-total) % lanes
    if rem:
        pred_flat = jnp.pad(pred_flat, (0, rem))
        gt_flat = jnp.pad(gt_flat, (0, rem))
    rows = (total + rem) // lanes
    pred2d = pred_flat.reshape(rows, lanes)
    gt2d = gt_flat.reshape(rows, lanes)

    # ~1 MiB f32 per input block at the defaults (512 x 512); multiple of 8.
    tile_rows = max(8, min(max_tile_rows, ((rows + 7) // 8) * 8))
    num_blocks = -(-rows // tile_rows)
    splits = num_splits if num_blocks >= num_splits else 1
    grid_k = -(-num_blocks // splits)

    def in_map(c, k):
        # Clamp so a fully-out-of-range duplicate block re-reads the last real
        # block; its contribution is masked to zero inside the kernel.
        return (jnp.minimum(c * grid_k + k, num_blocks - 1), 0)

    kernel = functools.partial(_masked_l1_kernel, rows=rows,
                               threshold=float(threshold))

    sum_parts, cnt_parts = pl.pallas_call(
        kernel,
        out_shape=(jax.ShapeDtypeStruct((splits, 8, lanes), jnp.float32),
                   jax.ShapeDtypeStruct((splits, 8, lanes), jnp.float32)),
        grid_spec=pltpu.PrefetchScalarGridSpec(
            num_scalar_prefetch=0,
            grid=(splits, grid_k),
            in_specs=[
                pl.BlockSpec((tile_rows, lanes), in_map),
                pl.BlockSpec((tile_rows, lanes), in_map),
            ],
            out_specs=[
                pl.BlockSpec((None, 8, lanes), lambda c, k: (c, 0, 0)),
                pl.BlockSpec((None, 8, lanes), lambda c, k: (c, 0, 0)),
            ],
        ),
        compiler_params=pltpu.CompilerParams(
            dimension_semantics=("parallel", "arbitrary"),
            vmem_limit_bytes=32 * 1024 * 1024),
    )(pred2d, gt2d)

    # Single cheap cross-lane reduce + divide, outside the hot loop.
    # TODO(synk): count == 0 (no valid pixel) yields NaN, same as the naive
    # PyTorch implementation.
    return jnp.sum(sum_parts) / jnp.sum(cnt_parts)


def masked_l1_loss_ref(prediction, target, threshold=100):
    pred = jnp.squeeze(prediction, axis=1).astype(jnp.float32)
    gt = target.astype(jnp.float32)
    valid = gt > 0.0
    gt_norm = jnp.minimum(gt, float(threshold)) / float(threshold)
    diff = jnp.abs(gt_norm - pred)
    return jnp.sum(jnp.where(valid, diff, 0.0)) / jnp.sum(valid.astype(jnp.float32))


def _check(prediction, target, threshold=100, **kw):
    out = jax.block_until_ready(masked_l1_loss(prediction, target, threshold, **kw))
    ref = masked_l1_loss_ref(prediction, target, threshold)
    assert jnp.allclose(out, ref, rtol=1e-5, atol=1e-6), (out, ref)


if __name__ == "__main__":
    key = jax.random.PRNGKey(0)
    k1, k2, k3, k4, k5, k6 = jax.random.split(key, 6)

    # Basic case (single partial block).
    N, H, W = 2, 16, 16
    prediction = jax.random.uniform(k1, (N, 1, H, W), dtype=jnp.float32)
    target = jax.random.uniform(k2, (N, H, W), dtype=jnp.float32,
                                minval=-20.0, maxval=150.0)
    _check(prediction, target, threshold=100)

    # Multi-block path exercising the 2-way split + clamped duplicate block
    # (small data, tiny tile override just to hit the code path).
    p2 = jax.random.uniform(k3, (2, 1, 80, 128), dtype=jnp.float32)
    t2 = jax.random.uniform(k4, (2, 80, 128), dtype=jnp.float32,
                            minval=-20.0, maxval=150.0)
    _check(p2, t2, threshold=100, max_tile_rows=8)

    # Non-aligned total (exercises the lane-pad + tail-mask path).
    p3 = jax.random.uniform(k5, (1, 1, 10, 30), dtype=jnp.float32)
    t3 = jax.random.uniform(k6, (1, 10, 30), dtype=jnp.float32,
                            minval=-20.0, maxval=150.0)
    _check(p3, t3, threshold=100)

    print("KERNEL_OK")
</pallas_src>

<mosaic_0001>
module attributes {stable_mosaic.version = 11 : i64} {
  func.func @_masked_l1_kernel(%arg0: i32, %arg1: i32, %arg2: memref<8x512xf32, #tpu.memory_space<vmem>>, %arg3: memref<8x512xf32, #tpu.memory_space<vmem>>, %arg4: memref<1x8x512xf32, #tpu.memory_space<vmem>>, %arg5: memref<1x8x512xf32, #tpu.memory_space<vmem>>) attributes {dimension_semantics = [#tpu.dimension_semantics<parallel>, #tpu.dimension_semantics<arbitrary>], iteration_bounds = array<i64: 1, 1>, scalar_prefetch = 0 : i64, scratch_operands = 0 : i64, tpu.core_type = #tpu.core_type<tc>, window_params = [{transform_indices = @transform_0, window_bounds = array<i64: 8, 512>}, {transform_indices = @transform_1, window_bounds = array<i64: 8, 512>}, {transform_indices = @transform_2, window_bounds = array<i64: 1, 8, 512>}, {transform_indices = @transform_3, window_bounds = array<i64: 1, 8, 512>}]} {
    %c0_i32 = arith.constant 0 : i32
    %0 = arith.cmpi eq, %arg1, %c0_i32 : i32
    %1 = arith.extui %0 : i1 to i32
    %c0_i32_0 = arith.constant 0 : i32
    %2 = arith.cmpi ne, %1, %c0_i32_0 : i32
    scf.if %2 {
      %cst_22 = arith.constant 0.000000e+00 : f32
      %43 = vector.broadcast %cst_22 : f32 to vector<8x512xf32>
      %c0_23 = arith.constant 0 : index
      %c0_24 = arith.constant 0 : index
      %c0_25 = arith.constant 0 : index
      %44 = vector.load %arg4[%c0_23, %c0_24, %c0_25] : memref<1x8x512xf32, #tpu.memory_space<vmem>>, vector<1x8x512xf32>
      %45 = vector.shape_cast %44 : vector<1x8x512xf32> to vector<8x512xf32>
      %46 = vector.shape_cast %43 : vector<8x512xf32> to vector<1x8x512xf32>
      tpu.vector_store %arg4[%c0_23, %c0_24, %c0_25], %46 {strides = array<i32>} : memref<1x8x512xf32, #tpu.memory_space<vmem>>, vector<1x8x512xf32>,
      %cst_26 = arith.constant 0.000000e+00 : f32
      %47 = vector.broadcast %cst_26 : f32 to vector<8x512xf32>
      %c0_27 = arith.constant 0 : index
      %c0_28 = arith.constant 0 : index
      %c0_29 = arith.constant 0 : index
      %48 = vector.load %arg5[%c0_27, %c0_28, %c0_29] : memref<1x8x512xf32, #tpu.memory_space<vmem>>, vector<1x8x512xf32>
      %49 = vector.shape_cast %48 : vector<1x8x512xf32> to vector<8x512xf32>
      %50 = vector.shape_cast %47 : vector<8x512xf32> to vector<1x8x512xf32>
      tpu.vector_store %arg5[%c0_27, %c0_28, %c0_29], %50 {strides = array<i32>} : memref<1x8x512xf32, #tpu.memory_space<vmem>>, vector<1x8x512xf32>,
    } else {
    }
    %c0 = arith.constant 0 : index
    %c0_1 = arith.constant 0 : index
    %3 = vector.load %arg3[%c0, %c0_1] : memref<8x512xf32, #tpu.memory_space<vmem>>, vector<8x512xf32>
    %c0_2 = arith.constant 0 : index
    %c0_3 = arith.constant 0 : index
    %4 = vector.load %arg2[%c0_2, %c0_3] : memref<8x512xf32, #tpu.memory_space<vmem>>, vector<8x512xf32>
    %c1_i32 = arith.constant 1 : i32
    %5 = arith.muli %arg0, %c1_i32 : i32
    %6 = arith.addi %5, %arg1 : i32
    %c8_i32 = arith.constant 8 : i32
    %7 = arith.muli %6, %c8_i32 : i32
    %8 = tpu.iota {dimensions = array<i32: 0>} : vector<8x1xi32>
    %9 = vector.broadcast %7 : i32 to vector<8x1xi32>
    %10 = arith.addi %8, %9 : vector<8x1xi32>
    %c1_i32_4 = arith.constant 1 : i32
    %11 = vector.broadcast %c1_i32_4 : i32 to vector<8x1xi32>
    %12 = arith.cmpi slt, %10, %11 : vector<8x1xi32>
    %cst = arith.constant 0.000000e+00 : f32
    %13 = vector.broadcast %cst : f32 to vector<8x512xf32>
    %14 = arith.cmpf ogt, %3, %13 : vector<8x512xf32>
    %15 = vector.broadcast %12 : vector<8x1xi1> to vector<8x512xi1>
    %16 = arith.andi %14, %15 : vector<8x512xi1>
    %cst_5 = arith.constant 1.000000e+02 : f32
    %17 = vector.broadcast %cst_5 : f32 to vector<8x512xf32>
    %18 = arith.minimumf %3, %17 : vector<8x512xf32>
    %cst_6 = arith.constant 0.00999999977 : f32
    %19 = vector.broadcast %cst_6 : f32 to vector<8x512xf32>
    %20 = arith.mulf %18, %19 : vector<8x512xf32>
    %21 = arith.subf %20, %4 : vector<8x512xf32>
    %22 = math.absf %21 : vector<8x512xf32>
    %cst_7 = arith.constant 0.000000e+00 : f32
    %23 = vector.broadcast %cst_7 : f32 to vector<8x512xf32>
    %24 = arith.select %16, %22, %23 : vector<8x512xi1>, vector<8x512xf32>
    %25 = arith.extui %16 : vector<8x512xi1> to vector<8x512xi32>
    %26 = arith.sitofp %25 : vector<8x512xi32> to vector<8x512xf32>
    %c0_8 = arith.constant 0 : index
    %c0_9 = arith.constant 0 : index
    %c0_10 = arith.constant 0 : index
    %27 = vector.load %arg4[%c0_8, %c0_9, %c0_10] : memref<1x8x512xf32, #tpu.memory_space<vmem>>, vector<1x8x512xf32>
    %28 = vector.shape_cast %27 : vector<1x8x512xf32> to vector<8x512xf32>
    %29 = vector.shape_cast %24 : vector<8x512xf32> to vector<1x8x512xf32>
    %cst_11 = arith.constant dense<0.000000e+00> : vector<8x512xf32>
    %30 = vector.multi_reduction <add>, %29, %cst_11 [0] : vector<1x8x512xf32> to vector<8x512xf32>
    %31 = arith.addf %28, %30 : vector<8x512xf32>
    %c0_12 = arith.constant 0 : index
    %c0_13 = arith.constant 0 : index
    %c0_14 = arith.constant 0 : index
    %32 = vector.load %arg4[%c0_12, %c0_13, %c0_14] : memref<1x8x512xf32, #tpu.memory_space<vmem>>, vector<1x8x512xf32>
    %33 = vector.shape_cast %32 : vector<1x8x512xf32> to vector<8x512xf32>
    %34 = vector.shape_cast %31 : vector<8x512xf32> to vector<1x8x512xf32>
    tpu.vector_store %arg4[%c0_12, %c0_13, %c0_14], %34 {strides = array<i32>} : memref<1x8x512xf32, #tpu.memory_space<vmem>>, vector<1x8x512xf32>,
    %c0_15 = arith.constant 0 : index
    %c0_16 = arith.constant 0 : index
    %c0_17 = arith.constant 0 : index
    %35 = vector.load %arg5[%c0_15, %c0_16, %c0_17] : memref<1x8x512xf32, #tpu.memory_space<vmem>>, vector<1x8x512xf32>
    %36 = vector.shape_cast %35 : vector<1x8x512xf32> to vector<8x512xf32>
    %37 = vector.shape_cast %26 : vector<8x512xf32> to vector<1x8x512xf32>
    %cst_18 = arith.constant dense<0.000000e+00> : vector<8x512xf32>
    %38 = vector.multi_reduction <add>, %37, %cst_18 [0] : vector<1x8x512xf32> to vector<8x512xf32>
    %39 = arith.addf %36, %38 : vector<8x512xf32>
    %c0_19 = arith.constant 0 : index
    %c0_20 = arith.constant 0 : index
    %c0_21 = arith.constant 0 : index
    %40 = vector.load %arg5[%c0_19, %c0_20, %c0_21] : memref<1x8x512xf32, #tpu.memory_space<vmem>>, vector<1x8x512xf32>
    %41 = vector.shape_cast %40 : vector<1x8x512xf32> to vector<8x512xf32>
    %42 = vector.shape_cast %39 : vector<8x512xf32> to vector<1x8x512xf32>
    tpu.vector_store %arg5[%c0_19, %c0_20, %c0_21], %42 {strides = array<i32>} : memref<1x8x512xf32, #tpu.memory_space<vmem>>, vector<1x8x512xf32>,
    return
  }
  func.func @transform_0(%arg0: i32, %arg1: i32) -> (i32, i32) {
    %c1_i32 = arith.constant 1 : i32
    %0 = arith.muli %arg0, %c1_i32 : i32
    %1 = arith.addi %0, %arg1 : i32
    %c0_i32 = arith.constant 0 : i32
    %2 = arith.minsi %1, %c0_i32 : i32
    %c0_i32_0 = arith.constant 0 : i32
    %c0_i32_1 = arith.constant 0 : i32
    return %2, %c0_i32_0 : i32, i32
  }
  func.func @transform_1(%arg0: i32, %arg1: i32) -> (i32, i32) {
    %c1_i32 = arith.constant 1 : i32
    %0 = arith.muli %arg0, %c1_i32 : i32
    %1 = arith.addi %0, %arg1 : i32
    %c0_i32 = arith.constant 0 : i32
    %2 = arith.minsi %1, %c0_i32 : i32
    %c0_i32_0 = arith.constant 0 : i32
    %c0_i32_1 = arith.constant 0 : i32
    return %2, %c0_i32_0 : i32, i32
  }
  func.func @transform_2(%arg0: i32, %arg1: i32) -> (i32, i32, i32) {
    %c0_i32 = arith.constant 0 : i32
    %c0_i32_0 = arith.constant 0 : i32
    %c0_i32_1 = arith.constant 0 : i32
    return %arg0, %c0_i32, %c0_i32_0 : i32, i32, i32
  }
  func.func @transform_3(%arg0: i32, %arg1: i32) -> (i32, i32, i32) {
    %c0_i32 = arith.constant 0 : i32
    %c0_i32_0 = arith.constant 0 : i32
    %c0_i32_1 = arith.constant 0 : i32
    return %arg0, %c0_i32, %c0_i32_0 : i32, i32, i32
  }
}

</mosaic_0001>

<llo_original>
// kernel: tpu_custom_call.1
$region0: #{tpu_custom_call.1}
  #allocation0 [shape = 'u32[]', space=smem, size = 0x4, offset = 0x4, fixed_abs, tag = 'smem constant byte address 0x4 - core index']
  #allocation1 [shape = 'u32[144,128]{1,0:T(1,128)}', space=vmem, size = 0x12000, scoped, tag = 'internal scratch']
  %s0 = inlined_call_operand.hbm [shape: f32[1,512], index: 0, kind: input, shape index: {}]
  %s1 = inlined_call_operand.hbm [shape: f32[1,512], index: 1, kind: input, shape index: {}]
  %s2 = inlined_call_operand.hbm [shape: f32[1,8,512], index: 2, kind: output, shape index: {0}]
  %s3 = inlined_call_operand.hbm [shape: f32[1,8,512], index: 3, kind: output, shape index: {1}]
  %4 = xla_tuple %s2, %s3
  %s5 = sld [smem:[#allocation0]]
  $region38: #{tpu_custom_call.1} parent=0
    _
  %s7 = ssub.s32 1, %s5
  %s8 = scalar_select 0, %s7, %s5
  $region1: #{tpu_custom_call.1} parent=0
    #allocation2 [shape = 'u8[16384]{0}', space=vmem, size = 0x4000, scoped, tag = 'input window, operand 0, single buffered']
    #allocation3 [shape = 's32[1]{0}', space=sflag, size = 0x4, scoped, tag = 'scoped memory for tpu_custom_call.1']
    #allocation4 [shape = 's32[1]{0}', space=sflag, size = 0x4, scoped, tag = 'scoped memory for tpu_custom_call.1']
    #allocation5 [shape = 'u8[16384]{0}', space=vmem, size = 0x4000, scoped, tag = 'input window, operand 1, single buffered']
    #allocation6 [shape = 's32[1]{0}', space=sflag, size = 0x4, scoped, tag = 'scoped memory for tpu_custom_call.1']
    #allocation7 [shape = 'u8[16384]{0}', space=vmem, size = 0x4000, scoped, tag = 'output window, operand 0, single buffered']
    #allocation8 [shape = 'u8[16384]{0}', space=vmem, size = 0x4000, scoped, tag = 'output window, operand 1, single buffered']
    #allocation9 [shape = 's32[1]{0}', space=sflag, size = 0x4, scoped, tag = 'scoped memory for tpu_custom_call.1']
    %9 = vsyncpa [#allocation3], 0
    %10 = vsyncpa [#allocation6], 0
    %11 = vsyncpa [#allocation4], 0
    %12 = vsyncpa [#allocation9], 0
    // Predicated region
    $region2: #{tpu_custom_call.1} parent=1 // pred_check
      _
    $region3: #{tpu_custom_call.1} parent=1 // pred_check_branch
      %14 = sbr.rel (0) target = $region5
    $region4: #{tpu_custom_call.1} parent=1 // pred_region
      %s15 = sadd.s32 0, 0
      %p16 = scmp.lt.s32.totalorder %s15, 0
      %s17 = scalar_select %p16, %s15, 0
      %s18 = smul.u32 8, %s17
      %s19 = ssub.s32 1, %s18
      %s20 = smul.u32 16, %s19
      %s21 = smul.u32 %s20, 4
      %s23 = ssub.s32 512, %s21
      %24 = vsyncadd [#allocation3], %s23
      %p25 = scmp.ne.s32.totalorder 0, %s21
      %s26 = smul.addr %s18, 4
      %s27 = smul.addr %s26, 16
      %s28 = scalar_lea.hbm %s0, %s27
      %s29 = smul.u32 4, %s19
      %s30 = sshll.u32 [#allocation2], 4
      %s31 = int_to_ptr.vmem [resolvable:$true] %s30
      %s32 = sshll.u32 %s29, 4
      %36 = dma.hbm_to_vmem [thread:$0]  (%p25), %s28, %s32, %s31, [#allocation3], 64, 64, 4
    $region5: #{tpu_custom_call.1} parent=1 // pred_fallthru
      _
    // Predicated region
    $region6: #{tpu_custom_call.1} parent=1 // pred_check
      _
    $region7: #{tpu_custom_call.1} parent=1 // pred_check_branch
      %38 = sbr.rel (0) target = $region9
    $region8: #{tpu_custom_call.1} parent=1 // pred_region
      %s39 = sadd.s32 0, 0
      %p40 = scmp.lt.s32.totalorder %s39, 0
      %s41 = scalar_select %p40, %s39, 0
      %s42 = smul.u32 8, %s41
      %s43 = ssub.s32 1, %s42
      %s44 = smul.u32 16, %s43
      %s45 = smul.u32 %s44, 4
      %s47 = ssub.s32 512, %s45
      %48 = vsyncadd [#allocation6], %s47
      %p49 = scmp.ne.s32.totalorder 0, %s45
      %s50 = smul.addr %s42, 4
      %s51 = smul.addr %s50, 16
      %s52 = scalar_lea.hbm %s1, %s51
      %s53 = smul.u32 4, %s43
      %s54 = sshll.u32 [#allocation5], 4
      %s55 = int_to_ptr.vmem [resolvable:$true] %s54
      %s56 = sshll.u32 %s53, 4
      %60 = dma.hbm_to_vmem [thread:$0]  (%p49), %s52, %s56, %s55, [#allocation6], 64, 64, 4
    $region9: #{tpu_custom_call.1} parent=1 // pred_fallthru
      _
    // Predicated region
    $region10: #{tpu_custom_call.1} parent=1 // pred_check
      _
    $region11: #{tpu_custom_call.1} parent=1 // pred_check_branch
      %62 = sbr.rel (0) target = $region13
    $region12: #{tpu_custom_call.1} parent=1 // pred_region
      %63 = dma.done [#allocation3], 512
    $region13: #{tpu_custom_call.1} parent=1 // pred_fallthru
      _
    // Predicated region
    $region14: #{tpu_custom_call.1} parent=1 // pred_check
      _
    $region15: #{tpu_custom_call.1} parent=1 // pred_check_branch
      %65 = sbr.rel (0) target = $region17
    $region16: #{tpu_custom_call.1} parent=1 // pred_region
      %66 = dma.done [#allocation6], 512
    $region17: #{tpu_custom_call.1} parent=1 // pred_fallthru
      _
    %s67 = sadd.s32 0, 0
    %p68 = scmp.lt.s32.totalorder %s67, 0
    %s69 = scalar_select %p68, %s67, 0
    %s70 = smul.u32 8, %s69
    %s71 = ssub.s32 1, %s70
    %s72 = smul.u32 16, %s71
    %s73 = smul.u32 %s72, 4
    %s74 = sadd.s32 0, 0
    %p75 = scmp.lt.s32.totalorder %s74, 0
    %s76 = scalar_select %p75, %s74, 0
    %s77 = smul.u32 8, %s76
    %s78 = ssub.s32 1, %s77
    %s79 = smul.u32 16, %s78
    %s80 = smul.u32 %s79, 4
    %p81 = scmp.eq.s32.totalorder 0, 0
    // Predicated region
    $region18: #{tpu_custom_call.1} parent=1 // pred_check
      %p82 = pneg %p81
    $region19: #{tpu_custom_call.1} parent=1 // pred_check_branch
      %84 = sbr.rel (%p82) target = $region21
    $region20: #{tpu_custom_call.1} parent=1 // pred_region
      %85 = vst [vmem:[#allocation7] sm:$0xff] 0.0
      %86 = vst [vmem:[#allocation7 + $0x8] sm:$0xff] 0.0
      %87 = vst [vmem:[#allocation7 + $0x10] sm:$0xff] 0.0
      %88 = vst [vmem:[#allocation7 + $0x18] sm:$0xff] 0.0
      %89 = vst [vmem:[#allocation8] sm:$0xff] 0.0
      %90 = vst [vmem:[#allocation8 + $0x8] sm:$0xff] 0.0
      %91 = vst [vmem:[#allocation8 + $0x10] sm:$0xff] 0.0
      %92 = vst [vmem:[#allocation8 + $0x18] sm:$0xff] 0.0
    $region21: #{tpu_custom_call.1} parent=1 // pred_fallthru
      _
    %v93 = vld [vmem:[#allocation5] sm:$0xf]
    %v94 = vld [vmem:[#allocation5 + $0x4] sm:$0xf]
    %v95 = vld [vmem:[#allocation5 + $0x8] sm:$0xf]
    %v96 = vld [vmem:[#allocation5 + $0xc] sm:$0xf]
    %v97 = vld [vmem:[#allocation5 + $0x10] sm:$0xf]
    %v98 = vld [vmem:[#allocation5 + $0x14] sm:$0xf]
    %v99 = vld [vmem:[#allocation5 + $0x18] sm:$0xf]
    %v100 = vld [vmem:[#allocation5 + $0x1c] sm:$0xf]
    %v101 = vld [vmem:[#allocation2] sm:$0xf]
    %v102 = vld [vmem:[#allocation2 + $0x4] sm:$0xf]
    %v103 = vld [vmem:[#allocation2 + $0x8] sm:$0xf]
    %v104 = vld [vmem:[#allocation2 + $0xc] sm:$0xf]
    %v105 = vld [vmem:[#allocation2 + $0x10] sm:$0xf]
    %v106 = vld [vmem:[#allocation2 + $0x14] sm:$0xf]
    %v107 = vld [vmem:[#allocation2 + $0x18] sm:$0xf]
    %v108 = vld [vmem:[#allocation2 + $0x1c] sm:$0xf]
    %s109 = sadd.s32 0, 0
    %s110 = smul.u32 %s109, 8
    %v111 = vlaneseq
    %v112 = vshrl.u32 %v111, 7
    %v113 = vstv %s110
    %v114 = vadd.s32 %v112, %v113
    %vm115 = vcmp.lt.s32.totalorder %v114, 1
    %vm116 = vcmp.gt.f32.partialorder %v93, 0.0
    %vm117 = vcmp.gt.f32.partialorder %v94, 0.0
    %vm118 = vcmp.gt.f32.partialorder %v95, 0.0
    %vm119 = vcmp.gt.f32.partialorder %v96, 0.0
    %vm120 = vcmp.gt.f32.partialorder %v97, 0.0
    %vm121 = vcmp.gt.f32.partialorder %v98, 0.0
    %vm122 = vcmp.gt.f32.partialorder %v99, 0.0
    %vm123 = vcmp.gt.f32.partialorder %v100, 0.0
    %v124 = vsel %vm115, 1, 0
    %vm125 = vcmp.eq.s32.totalorder %v124, 1
    %v126 = vsel %vm125, 1, 0
    %v127 = vlaneseq
    %v128 = vshrl.u32 %v127, 7
    %v129 = vsub.s32 0, %v128
    %v130 = vrot.slane %v126, %v129
    %v131 = vlaneseq
    %v132 = vshrl.u32 %v131, 7
    %v133 = vsub.s32 1, %v132
    %v134 = vrot.slane %v126, %v133
    %v135 = vlaneseq
    %v136 = vshrl.u32 %v135, 7
    %v137 = vsub.s32 2, %v136
    %v138 = vrot.slane %v126, %v137
    %v139 = vlaneseq
    %v140 = vshrl.u32 %v139, 7
    %v141 = vsub.s32 3, %v140
    %v142 = vrot.slane %v126, %v141
    %v143 = vlaneseq
    %v144 = vshrl.u32 %v143, 7
    %v145 = vsub.s32 4, %v144
    %v146 = vrot.slane %v126, %v145
    %v147 = vlaneseq
    %v148 = vshrl.u32 %v147, 7
    %v149 = vsub.s32 5, %v148
    %v150 = vrot.slane %v126, %v149
    %v151 = vlaneseq
    %v152 = vshrl.u32 %v151, 7
    %v153 = vsub.s32 6, %v152
    %v154 = vrot.slane %v126, %v153
    %v155 = vlaneseq
    %v156 = vshrl.u32 %v155, 7
    %v157 = vsub.s32 7, %v156
    %v158 = vrot.slane %v126, %v157
    %vm159 = vcmp.ne.s32.totalorder %v130, 0
    %vm160 = vcmp.ne.s32.totalorder %v134, 0
    %vm161 = vcmp.ne.s32.totalorder %v138, 0
    %vm162 = vcmp.ne.s32.totalorder %v142, 0
    %vm163 = vcmp.ne.s32.totalorder %v146, 0
    %vm164 = vcmp.ne.s32.totalorder %v150, 0
    %vm165 = vcmp.ne.s32.totalorder %v154, 0
    %vm166 = vcmp.ne.s32.totalorder %v158, 0
    %vm167 = vmand %vm116, %vm159
    %vm168 = vmand %vm117, %vm160
    %vm169 = vmand %vm118, %vm161
    %vm170 = vmand %vm119, %vm162
    %vm171 = vmand %vm120, %vm163
    %vm172 = vmand %vm121, %vm164
    %vm173 = vmand %vm122, %vm165
    %vm174 = vmand %vm123, %vm166
    %v175 = vmin.f32 %v93, 100.0
    %v176 = vmin.f32 %v94, 100.0
    %v177 = vmin.f32 %v95, 100.0
    %v178 = vmin.f32 %v96, 100.0
    %v179 = vmin.f32 %v97, 100.0
    %v180 = vmin.f32 %v98, 100.0
    %v181 = vmin.f32 %v99, 100.0
    %v182 = vmin.f32 %v100, 100.0
    %v183 = vmul.f32 %v175, 0.01
    %v184 = vmul.f32 %v176, 0.01
    %v185 = vmul.f32 %v177, 0.01
    %v186 = vmul.f32 %v178, 0.01
    %v187 = vmul.f32 %v179, 0.01
    %v188 = vmul.f32 %v180, 0.01
    %v189 = vmul.f32 %v181, 0.01
    %v190 = vmul.f32 %v182, 0.01
    %v191 = vsub.f32 %v183, %v101
    %v192 = vsub.f32 %v184, %v102
    %v193 = vsub.f32 %v185, %v103
    %v194 = vsub.f32 %v186, %v104
    %v195 = vsub.f32 %v187, %v105
    %v196 = vsub.f32 %v188, %v106
    %v197 = vsub.f32 %v189, %v107
    %v198 = vsub.f32 %v190, %v108
    %v199 = vand.u32 2147483647, %v191
    %v200 = vand.u32 2147483647, %v192
    %v201 = vand.u32 2147483647, %v193
    %v202 = vand.u32 2147483647, %v194
    %v203 = vand.u32 2147483647, %v195
    %v204 = vand.u32 2147483647, %v196
    %v205 = vand.u32 2147483647, %v197
    %v206 = vand.u32 2147483647, %v198
    %v207 = vsel %vm167, %v199, 0.0
    %v208 = vsel %vm168, %v200, 0.0
    %v209 = vsel %vm169, %v201, 0.0
    %v210 = vsel %vm170, %v202, 0.0
    %v211 = vsel %vm171, %v203, 0.0
    %v212 = vsel %vm172, %v204, 0.0
    %v213 = vsel %vm173, %v205, 0.0
    %v214 = vsel %vm174, %v206, 0.0
    %v215 = vsel %vm167, 1, 0
    %v216 = vsel %vm168, 1, 0
    %v217 = vsel %vm169, 1, 0
    %v218 = vsel %vm170, 1, 0
    %v219 = vsel %vm171, 1, 0
    %v220 = vsel %vm172, 1, 0
    %v221 = vsel %vm173, 1, 0
    %v222 = vsel %vm174, 1, 0
    %v223 = vcvt.s32.f32 %v215
    %v224 = vcvt.s32.f32 %v216
    %v225 = vcvt.s32.f32 %v217
    %v226 = vcvt.s32.f32 %v218
    %v227 = vcvt.s32.f32 %v219
    %v228 = vcvt.s32.f32 %v220
    %v229 = vcvt.s32.f32 %v221
    %v230 = vcvt.s32.f32 %v222
    %v231 = vld [vmem:[#allocation7] sm:$0xff]
    %v232 = vld [vmem:[#allocation7 + $0x8] sm:$0xff]
    %v233 = vld [vmem:[#allocation7 + $0x10] sm:$0xff]
    %v234 = vld [vmem:[#allocation7 + $0x18] sm:$0xff]
    %v235 = vadd.f32 %v207, 0.0
    %v236 = vadd.f32 %v208, 0.0
    %v237 = vadd.f32 %v209, 0.0
    %v238 = vadd.f32 %v210, 0.0
    %v239 = vadd.f32 %v211, 0.0
    %v240 = vadd.f32 %v212, 0.0
    %v241 = vadd.f32 %v213, 0.0
    %v242 = vadd.f32 %v214, 0.0
    %v251 = vcombine.low %v235, %v236
    %v252 = vcombine.low %v237, %v238
    %v253 = vcombine.low %v239, %v240
    %v254 = vcombine.low %v241, %v242
    %v256 = vunpack.c.l.s4 1966171168
    %v257 = vunpack.c.0.s8 %v256
    %v258 = vlaneseq
    %v259 = vshrl.u32 %v258, 7
    %v260 = vsub.s32 %v257, %v259
    %v261 = vrot.slane %v251, %v260
    %v263 = vunpack.c.l.s4 1966171168
    %v264 = vunpack.c.0.s8 %v263
    %v265 = vlaneseq
    %v266 = vshrl.u32 %v265, 7
    %v267 = vsub.s32 %v264, %v266
    %v268 = vrot.slane %v252, %v267
    %v270 = vunpack.c.l.s4 1966171168
    %v271 = vunpack.c.0.s8 %v270
    %v272 = vlaneseq
    %v273 = vshrl.u32 %v272, 7
    %v274 = vsub.s32 %v271, %v273
    %v275 = vrot.slane %v253, %v274
    %v277 = vunpack.c.l.s4 1966171168
    %v278 = vunpack.c.0.s8 %v277
    %v279 = vlaneseq
    %v280 = vshrl.u32 %v279, 7
    %v281 = vsub.s32 %v278, %v280
    %v282 = vrot.slane %v254, %v281
    %v283 = vcombine.low %v261, %v268
    %v284 = vcombine.high %v261, %v268
    %v285 = vcombine.low %v275, %v282
    %v286 = vcombine.high %v275, %v282
    %v288 = vunpack.c.l.s4 1966171168
    %v289 = vunpack.c.0.s8 %v288
    %v290 = vlaneseq
    %v291 = vshrl.u32 %v290, 7
    %v292 = vsub.s32 %v289, %v291
    %v293 = vrot.slane %v283, %v292
    %v295 = vunpack.c.l.s4 1966171168
    %v296 = vunpack.c.0.s8 %v295
    %v297 = vlaneseq
    %v298 = vshrl.u32 %v297, 7
    %v299 = vsub.s32 %v296, %v298
    %v300 = vrot.slane %v284, %v299
    %v302 = vunpack.c.l.s4 1966171168
    %v303 = vunpack.c.0.s8 %v302
    %v304 = vlaneseq
    %v305 = vshrl.u32 %v304, 7
    %v306 = vsub.s32 %v303, %v305
    %v307 = vrot.slane %v285, %v306
    %v309 = vunpack.c.l.s4 1966171168
    %v310 = vunpack.c.0.s8 %v309
    %v311 = vlaneseq
    %v312 = vshrl.u32 %v311, 7
    %v313 = vsub.s32 %v310, %v312
    %v314 = vrot.slane %v286, %v313
    %v315 = vcombine.low %v293, %v307
    %v316 = vcombine.high %v293, %v307
    %v317 = vcombine.low %v300, %v314
    %v318 = vcombine.high %v300, %v314
    %v323 = vadd.f32 %v231, %v315
    %v324 = vadd.f32 %v232, %v317
    %v325 = vadd.f32 %v233, %v316
    %v326 = vadd.f32 %v234, %v318
    %327 = vst [vmem:[#allocation7] sm:$0xff] %v323
    %328 = vst [vmem:[#allocation7 + $0x8] sm:$0xff] %v324
    %329 = vst [vmem:[#allocation7 + $0x10] sm:$0xff] %v325
    %330 = vst [vmem:[#allocation7 + $0x18] sm:$0xff] %v326
    %v331 = vld [vmem:[#allocation8] sm:$0xff]
    %v332 = vld [vmem:[#allocation8 + $0x8] sm:$0xff]
    %v333 = vld [vmem:[#allocation8 + $0x10] sm:$0xff]
    %v334 = vld [vmem:[#allocation8 + $0x18] sm:$0xff]
    %v335 = vadd.f32 %v223, 0.0
    %v336 = vadd.f32 %v224, 0.0
    %v337 = vadd.f32 %v225, 0.0
    %v338 = vadd.f32 %v226, 0.0
    %v339 = vadd.f32 %v227, 0.0
    %v340 = vadd.f32 %v228, 0.0
    %v341 = vadd.f32 %v229, 0.0
    %v342 = vadd.f32 %v230, 0.0
    %v351 = vcombine.low %v335, %v336
    %v352 = vcombine.low %v337, %v338
    %v353 = vcombine.low %v339, %v340
    %v354 = vcombine.low %v341, %v342
    %v356 = vunpack.c.l.s4 1966171168
    %v357 = vunpack.c.0.s8 %v356
    %v358 = vlaneseq
    %v359 = vshrl.u32 %v358, 7
    %v360 = vsub.s32 %v357, %v359
    %v361 = vrot.slane %v351, %v360
    %v363 = vunpack.c.l.s4 1966171168
    %v364 = vunpack.c.0.s8 %v363
    %v365 = vlaneseq
    %v366 = vshrl.u32 %v365, 7
    %v367 = vsub.s32 %v364, %v366
    %v368 = vrot.slane %v352, %v367
    %v370 = vunpack.c.l.s4 1966171168
    %v371 = vunpack.c.0.s8 %v370
    %v372 = vlaneseq
    %v373 = vshrl.u32 %v372, 7
    %v374 = vsub.s32 %v371, %v373
    %v375 = vrot.slane %v353, %v374
    %v377 = vunpack.c.l.s4 1966171168
    %v378 = vunpack.c.0.s8 %v377
    %v379 = vlaneseq
    %v380 = vshrl.u32 %v379, 7
    %v381 = vsub.s32 %v378, %v380
    %v382 = vrot.slane %v354, %v381
    %v383 = vcombine.low %v361, %v368
    %v384 = vcombine.high %v361, %v368
    %v385 = vcombine.low %v375, %v382
    %v386 = vcombine.high %v375, %v382
    %v388 = vunpack.c.l.s4 1966171168
    %v389 = vunpack.c.0.s8 %v388
    %v390 = vlaneseq
    %v391 = vshrl.u32 %v390, 7
    %v392 = vsub.s32 %v389, %v391
    %v393 = vrot.slane %v383, %v392
    %v395 = vunpack.c.l.s4 1966171168
    %v396 = vunpack.c.0.s8 %v395
    %v397 = vlaneseq
    %v398 = vshrl.u32 %v397, 7
    %v399 = vsub.s32 %v396, %v398
    %v400 = vrot.slane %v384, %v399
    %v402 = vunpack.c.l.s4 1966171168
    %v403 = vunpack.c.0.s8 %v402
    %v404 = vlaneseq
    %v405 = vshrl.u32 %v404, 7
    %v406 = vsub.s32 %v403, %v405
    %v407 = vrot.slane %v385, %v406
    %v409 = vunpack.c.l.s4 1966171168
    %v410 = vunpack.c.0.s8 %v409
    %v411 = vlaneseq
    %v412 = vshrl.u32 %v411, 7
    %v413 = vsub.s32 %v410, %v412
    %v414 = vrot.slane %v386, %v413
    %v415 = vcombine.low %v393, %v407
    %v416 = vcombine.high %v393, %v407
    %v417 = vcombine.low %v400, %v414
    %v418 = vcombine.high %v400, %v414
    %v423 = vadd.f32 %v331, %v415
    %v424 = vadd.f32 %v332, %v417
    %v425 = vadd.f32 %v333, %v416
    %v426 = vadd.f32 %v334, %v418
    %427 = vst [vmem:[#allocation8] sm:$0xff] %v423
    %428 = vst [vmem:[#allocation8 + $0x8] sm:$0xff] %v424
    %429 = vst [vmem:[#allocation8 + $0x10] sm:$0xff] %v425
    %430 = vst [vmem:[#allocation8 + $0x18] sm:$0xff] %v426
    // Predicated region
    $region22: #{tpu_custom_call.1} parent=1 // pred_check
      _
    $region23: #{tpu_custom_call.1} parent=1 // pred_check_branch
      %432 = sbr.rel (0) target = $region25
    $region24: #{tpu_custom_call.1} parent=1 // pred_region
      %s434 = ssub.s32 512, 512
      %435 = vsyncadd [#allocation4], %s434
      %s437 = sshll.u32 [#allocation7], 4
      %s438 = int_to_ptr.vmem [resolvable:$true] %s437
      %440 = dma.vmem_to_hbm [thread:$0]  %s438, 512, %s2, [#allocation4]
    $region25: #{tpu_custom_call.1} parent=1 // pred_fallthru
      _
    // Predicated region
    $region26: #{tpu_custom_call.1} parent=1 // pred_check
      _
    $region27: #{tpu_custom_call.1} parent=1 // pred_check_branch
      %442 = sbr.rel (0) target = $region29
    $region28: #{tpu_custom_call.1} parent=1 // pred_region
      %s444 = ssub.s32 512, 512
      %445 = vsyncadd [#allocation9], %s444
      %s447 = sshll.u32 [#allocation8], 4
      %s448 = int_to_ptr.vmem [resolvable:$true] %s447
      %450 = dma.vmem_to_hbm [thread:$0]  %s448, 512, %s3, [#allocation9]
    $region29: #{tpu_custom_call.1} parent=1 // pred_fallthru
      _
    // Predicated region
    $region30: #{tpu_custom_call.1} parent=1 // pred_check
      _
    $region31: #{tpu_custom_call.1} parent=1 // pred_check_branch
      %452 = sbr.rel (0) target = $region33
    $region32: #{tpu_custom_call.1} parent=1 // pred_region
      %453 = dma.done [#allocation4], 512
    $region33: #{tpu_custom_call.1} parent=1 // pred_fallthru
      _
    // Predicated region
    $region34: #{tpu_custom_call.1} parent=1 // pred_check
      _
    $region35: #{tpu_custom_call.1} parent=1 // pred_check_branch
      %455 = sbr.rel (0) target = $region37
    $region36: #{tpu_custom_call.1} parent=1 // pred_region
      %456 = dma.done [#allocation9], 512
    $region37: #{tpu_custom_call.1} parent=1 // pred_fallthru
      _
    %457 = vsyncpa [#allocation3], 1
    %458 = vsyncpa [#allocation6], 1
    %459 = vsyncpa [#allocation4], 1
    %460 = vsyncpa [#allocation9], 1

</llo_original>
